<compile_context>
chip_gen: v5e
topology: v5e:2x2
jax: 0.10.0
libtpu: 0.0.40
codegen_flags: <defaults>
</compile_context>

<pallas_src>
import functools

import jax
import jax.numpy as jnp
from jax.experimental import pallas as pl
from jax.experimental.pallas import tpu as pltpu


# ----------------------------- Pallas kernel -----------------------------
def _downsample_kernel(x_ref, w_ref, b_ref, o_ref, *, offsets, Ho, Wo):
    """Strided-conv / pooling kernel for one batch element.

    x_ref: (1, HB, WB, K)   stride-decomposed input slab, K = 4*2*C
    w_ref: (T, K, Cout)     one (K, Cout) tap matrix per (a, p) block offset
    b_ref: (1, Cout)        bias
    o_ref: (1, Ho*Wo, Cout) output
    """
    x = x_ref[0]                                   # (HB, WB, K) — fully VMEM resident
    k = x.shape[-1]
    cout = o_ref.shape[-1]
    acc = jnp.zeros((Ho * Wo, cout), jnp.float32)
    for t, (a, p) in enumerate(offsets):           # static, fully unrolled (<= 6 taps)
        win = x[a:a + Ho, p:p + Wo, :]             # (Ho, Wo, K) contiguous static slice
        lhs = win.reshape(Ho * Wo, k)              # (32, 32): sublane dim Wo == 8 (native)
        acc = acc + jnp.dot(lhs, w_ref[t], preferred_element_type=jnp.float32)
    o_ref[0] = (acc + b_ref[...]).astype(o_ref.dtype)


# ----------------------------- wrapper -----------------------------
def _stride_decompose(x_nhwc, HB, WB, C):
    """(B, 4*HB, 2*WB, C) -> (B, HB, WB, 4*2*C) with k = r*2*C + s*C + c."""
    B = x_nhwc.shape[0]
    X = x_nhwc.reshape(B, HB, 4, WB, 2, C)
    return jnp.transpose(X, (0, 1, 3, 2, 4, 5)).reshape(B, HB, WB, 8 * C)


def downsample_time_stride4(x_nchw, w, b, *, with_conv=True):
    B, C, H, W = x_nchw.shape
    x = jnp.transpose(x_nchw, (0, 2, 3, 1)).astype(jnp.float32)        # NHWC

    if with_conv:
        Cout, Cin, KH, KW = w.shape
        assert (Cin, KH, KW) == (C, 5, 5)
        # total padding: F.pad(0,1,0,1) (right/bottom +1) + Conv2d padding=1 (all sides)
        Hp, Wp = H + 3, W + 3
        Ho = (Hp - KH) // 4 + 1
        Wo = (Wp - KW) // 2 + 1
        HB, WB = Ho + 1, Wo + 2                    # block extents needed by the (a, p) offsets
        xpad = jnp.pad(x, ((0, 0), (1, 4 * HB - H - 1), (1, 2 * WB - W - 1), (0, 0)))
        X = _stride_decompose(xpad, HB, WB, C)     # (B, HB, WB, 8*C)

        # taps[a*3+p][(r*2+s)*C + ci, co] = w[co, ci, 4a+r, 2p+s]  (zero where ky/kx >= 5)
        wt = jnp.transpose(w, (2, 3, 1, 0))                            # (5, 5, Cin, Cout)
        wt = jnp.pad(wt, ((0, 3), (0, 1), (0, 0), (0, 0)))             # (8, 6, Cin, Cout)
        taps = jnp.transpose(wt.reshape(2, 4, 3, 2, C, Cout),
                             (0, 2, 1, 3, 4, 5)).reshape(6, 8 * C, Cout)
        offsets = tuple((a, p) for a in range(2) for p in range(3))
        bias = b.reshape(1, Cout).astype(jnp.float32)
    else:
        assert H % 4 == 0 and W % 2 == 0
        Cout = C
        Ho, Wo = H // 4, W // 2
        HB, WB = Ho, Wo
        X = _stride_decompose(x, HB, WB, C)        # exact reshape, no padding
        taps = jnp.tile(jnp.eye(C, dtype=jnp.float32) / 8.0, (8, 1)).reshape(1, 8 * C, C)
        offsets = ((0, 0),)
        bias = jnp.zeros((1, Cout), jnp.float32)

    K = 8 * C
    kern = functools.partial(_downsample_kernel, offsets=offsets, Ho=Ho, Wo=Wo)
    out = pl.pallas_call(
        kern,
        grid=(B,),
        in_specs=[
            pl.BlockSpec((1, HB, WB, K), lambda bb: (bb, 0, 0, 0)),
            pl.BlockSpec((len(offsets), K, Cout), lambda bb: (0, 0, 0)),
            pl.BlockSpec((1, Cout), lambda bb: (0, 0)),
        ],
        out_specs=pl.BlockSpec((1, Ho * Wo, Cout), lambda bb: (bb, 0, 0)),
        out_shape=jax.ShapeDtypeStruct((B, Ho * Wo, Cout), jnp.float32),
        compiler_params=pltpu.CompilerParams(dimension_semantics=("parallel",)),
    )(X, taps, bias)

    out = out.reshape(B, Ho, Wo, Cout)
    return jnp.transpose(out, (0, 3, 1, 2))                            # back to NCHW


# ----------------------------- pure-JAX references -----------------------------
def reference_conv(x, w, b):
    xp = jnp.pad(x, ((0, 0), (0, 0), (0, 1), (0, 1)))                  # F.pad(x, (0,1,0,1))
    out = jax.lax.conv_general_dilated(
        xp, w, window_strides=(4, 2), padding=((1, 1), (1, 1)),
        dimension_numbers=("NCHW", "OIHW", "NCHW"),
        precision=jax.lax.Precision.HIGHEST)
    return out + b[None, :, None, None]


def reference_avgpool(x):
    s = jax.lax.reduce_window(x, 0.0, jax.lax.add,
                              window_dimensions=(1, 1, 4, 2),
                              window_strides=(1, 1, 4, 2), padding="VALID")
    return s / 8.0


# ----------------------------- main -----------------------------
if __name__ == "__main__":
    key = jax.random.PRNGKey(0)
    kx, kw, kb = jax.random.split(key, 3)
    B, C, H, W = 2, 4, 16, 16
    x = jax.random.normal(kx, (B, C, H, W), dtype=jnp.float32)
    w = 0.05 * jax.random.normal(kw, (C, C, 5, 5), dtype=jnp.float32)
    b = 0.05 * jax.random.normal(kb, (C,), dtype=jnp.float32)

    # with_conv=True path
    fwd_conv = jax.jit(functools.partial(downsample_time_stride4, with_conv=True))
    out = jax.block_until_ready(fwd_conv(x, w, b))
    assert out.shape == (B, C, 4, 8), out.shape
    assert bool(jnp.all(jnp.isfinite(out)))
    ref = reference_conv(x, w, b)
    rel_err = float(jnp.max(jnp.abs(out - ref)) / (jnp.max(jnp.abs(ref)) + 1e-8))
    assert rel_err < 1e-2, rel_err

    # with_conv=False path (avg_pool2d (4,2))
    fwd_pool = jax.jit(functools.partial(downsample_time_stride4, with_conv=False))
    out2 = jax.block_until_ready(fwd_pool(x, w, b))
    assert out2.shape == (B, C, 4, 8), out2.shape
    ref2 = reference_avgpool(x)
    rel_err2 = float(jnp.max(jnp.abs(out2 - ref2)) / (jnp.max(jnp.abs(ref2)) + 1e-8))
    assert rel_err2 < 1e-2, rel_err2

    print("KERNEL_OK")
</pallas_src>

<mosaic_0001>
module attributes {stable_mosaic.version = 11 : i64} {
  func.func @_downsample_kernel(%arg0: i32, %arg1: memref<1x5x10x32xf32, #tpu.memory_space<vmem>>, %arg2: memref<6x32x4xf32, #tpu.memory_space<vmem>>, %arg3: memref<1x4xf32, #tpu.memory_space<vmem>>, %arg4: memref<1x32x4xf32, #tpu.memory_space<vmem>>) attributes {dimension_semantics = [#tpu.dimension_semantics<parallel>], iteration_bounds = array<i64: 2>, scalar_prefetch = 0 : i64, scratch_operands = 0 : i64, tpu.core_type = #tpu.core_type<tc>, window_params = [{transform_indices = @transform_0, window_bounds = array<i64: 1, 5, 10, 32>}, {pipeline_mode = #tpu.pipeline_mode<synchronous>, transform_indices = @transform_1, window_bounds = array<i64: 6, 32, 4>}, {pipeline_mode = #tpu.pipeline_mode<synchronous>, transform_indices = @transform_2, window_bounds = array<i64: 1, 4>}, {transform_indices = @transform_3, window_bounds = array<i64: 1, 32, 4>}]} {
    %c0 = arith.constant 0 : index
    %c0_0 = arith.constant 0 : index
    %c0_1 = arith.constant 0 : index
    %c0_2 = arith.constant 0 : index
    %0 = vector.load %arg1[%c0, %c0_0, %c0_1, %c0_2] : memref<1x5x10x32xf32, #tpu.memory_space<vmem>>, vector<1x5x10x32xf32>
    %1 = vector.shape_cast %0 : vector<1x5x10x32xf32> to vector<5x10x32xf32>
    %cst = arith.constant 0.000000e+00 : f32
    %2 = vector.broadcast %cst : f32 to vector<32x4xf32>
    %3 = vector.extract_strided_slice %1 {offsets = [0, 0, 0], sizes = [4, 8, 32], strides = [1, 1, 1]} : vector<5x10x32xf32> to vector<4x8x32xf32>
    %4 = vector.shape_cast %3 : vector<4x8x32xf32> to vector<32x32xf32>
    %c0_3 = arith.constant 0 : index
    %c0_4 = arith.constant 0 : index
    %c0_5 = arith.constant 0 : index
    %5 = vector.load %arg2[%c0_3, %c0_4, %c0_5] : memref<6x32x4xf32, #tpu.memory_space<vmem>>, vector<1x32x4xf32>
    %6 = vector.shape_cast %5 : vector<1x32x4xf32> to vector<32x4xf32>
    %cst_6 = arith.constant dense<0.000000e+00> : vector<32x4xf32>
    %7 = tpu.matmul %4, %6, %cst_6 {dimension_numbers = #tpu.dot_dimension_numbers<[1], [0], [0], [1], [0, 0, 1, 1], [], []>} : vector<32x32xf32>, vector<32x4xf32>, vector<32x4xf32> -> vector<32x4xf32>
    %8 = arith.addf %2, %7 : vector<32x4xf32>
    %9 = vector.extract_strided_slice %1 {offsets = [0, 1, 0], sizes = [4, 8, 32], strides = [1, 1, 1]} : vector<5x10x32xf32> to vector<4x8x32xf32>
    %10 = vector.shape_cast %9 : vector<4x8x32xf32> to vector<32x32xf32>
    %c1 = arith.constant 1 : index
    %c0_7 = arith.constant 0 : index
    %c0_8 = arith.constant 0 : index
    %11 = vector.load %arg2[%c1, %c0_7, %c0_8] : memref<6x32x4xf32, #tpu.memory_space<vmem>>, vector<1x32x4xf32>
    %12 = vector.shape_cast %11 : vector<1x32x4xf32> to vector<32x4xf32>
    %cst_9 = arith.constant dense<0.000000e+00> : vector<32x4xf32>
    %13 = tpu.matmul %10, %12, %cst_9 {dimension_numbers = #tpu.dot_dimension_numbers<[1], [0], [0], [1], [0, 0, 1, 1], [], []>} : vector<32x32xf32>, vector<32x4xf32>, vector<32x4xf32> -> vector<32x4xf32>
    %14 = arith.addf %8, %13 : vector<32x4xf32>
    %15 = vector.extract_strided_slice %1 {offsets = [0, 2, 0], sizes = [4, 8, 32], strides = [1, 1, 1]} : vector<5x10x32xf32> to vector<4x8x32xf32>
    %16 = vector.shape_cast %15 : vector<4x8x32xf32> to vector<32x32xf32>
    %c2 = arith.constant 2 : index
    %c0_10 = arith.constant 0 : index
    %c0_11 = arith.constant 0 : index
    %17 = vector.load %arg2[%c2, %c0_10, %c0_11] : memref<6x32x4xf32, #tpu.memory_space<vmem>>, vector<1x32x4xf32>
    %18 = vector.shape_cast %17 : vector<1x32x4xf32> to vector<32x4xf32>
    %cst_12 = arith.constant dense<0.000000e+00> : vector<32x4xf32>
    %19 = tpu.matmul %16, %18, %cst_12 {dimension_numbers = #tpu.dot_dimension_numbers<[1], [0], [0], [1], [0, 0, 1, 1], [], []>} : vector<32x32xf32>, vector<32x4xf32>, vector<32x4xf32> -> vector<32x4xf32>
    %20 = arith.addf %14, %19 : vector<32x4xf32>
    %21 = vector.extract_strided_slice %1 {offsets = [1, 0, 0], sizes = [4, 8, 32], strides = [1, 1, 1]} : vector<5x10x32xf32> to vector<4x8x32xf32>
    %22 = vector.shape_cast %21 : vector<4x8x32xf32> to vector<32x32xf32>
    %c3 = arith.constant 3 : index
    %c0_13 = arith.constant 0 : index
    %c0_14 = arith.constant 0 : index
    %23 = vector.load %arg2[%c3, %c0_13, %c0_14] : memref<6x32x4xf32, #tpu.memory_space<vmem>>, vector<1x32x4xf32>
    %24 = vector.shape_cast %23 : vector<1x32x4xf32> to vector<32x4xf32>
    %cst_15 = arith.constant dense<0.000000e+00> : vector<32x4xf32>
    %25 = tpu.matmul %22, %24, %cst_15 {dimension_numbers = #tpu.dot_dimension_numbers<[1], [0], [0], [1], [0, 0, 1, 1], [], []>} : vector<32x32xf32>, vector<32x4xf32>, vector<32x4xf32> -> vector<32x4xf32>
    %26 = arith.addf %20, %25 : vector<32x4xf32>
    %27 = vector.extract_strided_slice %1 {offsets = [1, 1, 0], sizes = [4, 8, 32], strides = [1, 1, 1]} : vector<5x10x32xf32> to vector<4x8x32xf32>
    %28 = vector.shape_cast %27 : vector<4x8x32xf32> to vector<32x32xf32>
    %c4 = arith.constant 4 : index
    %c0_16 = arith.constant 0 : index
    %c0_17 = arith.constant 0 : index
    %29 = vector.load %arg2[%c4, %c0_16, %c0_17] : memref<6x32x4xf32, #tpu.memory_space<vmem>>, vector<1x32x4xf32>
    %30 = vector.shape_cast %29 : vector<1x32x4xf32> to vector<32x4xf32>
    %cst_18 = arith.constant dense<0.000000e+00> : vector<32x4xf32>
    %31 = tpu.matmul %28, %30, %cst_18 {dimension_numbers = #tpu.dot_dimension_numbers<[1], [0], [0], [1], [0, 0, 1, 1], [], []>} : vector<32x32xf32>, vector<32x4xf32>, vector<32x4xf32> -> vector<32x4xf32>
    %32 = arith.addf %26, %31 : vector<32x4xf32>
    %33 = vector.extract_strided_slice %1 {offsets = [1, 2, 0], sizes = [4, 8, 32], strides = [1, 1, 1]} : vector<5x10x32xf32> to vector<4x8x32xf32>
    %34 = vector.shape_cast %33 : vector<4x8x32xf32> to vector<32x32xf32>
    %c5 = arith.constant 5 : index
    %c0_19 = arith.constant 0 : index
    %c0_20 = arith.constant 0 : index
    %35 = vector.load %arg2[%c5, %c0_19, %c0_20] : memref<6x32x4xf32, #tpu.memory_space<vmem>>, vector<1x32x4xf32>
    %36 = vector.shape_cast %35 : vector<1x32x4xf32> to vector<32x4xf32>
    %cst_21 = arith.constant dense<0.000000e+00> : vector<32x4xf32>
    %37 = tpu.matmul %34, %36, %cst_21 {dimension_numbers = #tpu.dot_dimension_numbers<[1], [0], [0], [1], [0, 0, 1, 1], [], []>} : vector<32x32xf32>, vector<32x4xf32>, vector<32x4xf32> -> vector<32x4xf32>
    %38 = arith.addf %32, %37 : vector<32x4xf32>
    %c0_22 = arith.constant 0 : index
    %c0_23 = arith.constant 0 : index
    %39 = vector.load %arg3[%c0_22, %c0_23] : memref<1x4xf32, #tpu.memory_space<vmem>>, vector<1x4xf32>
    %40 = vector.broadcast %39 : vector<1x4xf32> to vector<32x4xf32>
    %41 = arith.addf %38, %40 : vector<32x4xf32>
    %c0_24 = arith.constant 0 : index
    %c0_25 = arith.constant 0 : index
    %c0_26 = arith.constant 0 : index
    %42 = vector.load %arg4[%c0_24, %c0_25, %c0_26] : memref<1x32x4xf32, #tpu.memory_space<vmem>>, vector<1x32x4xf32>
    %43 = vector.shape_cast %42 : vector<1x32x4xf32> to vector<32x4xf32>
    %44 = vector.shape_cast %41 : vector<32x4xf32> to vector<1x32x4xf32>
    tpu.vector_store %arg4[%c0_24, %c0_25, %c0_26], %44 {strides = array<i32>} : memref<1x32x4xf32, #tpu.memory_space<vmem>>, vector<1x32x4xf32>,
    return
  }
  func.func @transform_0(%arg0: i32) -> (i32, i32, i32, i32) {
    %c0_i32 = arith.constant 0 : i32
    %c0_i32_0 = arith.constant 0 : i32
    %c0_i32_1 = arith.constant 0 : i32
    %c0_i32_2 = arith.constant 0 : i32
    return %arg0, %c0_i32, %c0_i32_0, %c0_i32_1 : i32, i32, i32, i32
  }
  func.func @transform_1(%arg0: i32) -> (i32, i32, i32) {
    %c0_i32 = arith.constant 0 : i32
    %c0_i32_0 = arith.constant 0 : i32
    %c0_i32_1 = arith.constant 0 : i32
    %c0_i32_2 = arith.constant 0 : i32
    return %c0_i32, %c0_i32_0, %c0_i32_1 : i32, i32, i32
  }
  func.func @transform_2(%arg0: i32) -> (i32, i32) {
    %c0_i32 = arith.constant 0 : i32
    %c0_i32_0 = arith.constant 0 : i32
    %c0_i32_1 = arith.constant 0 : i32
    return %c0_i32, %c0_i32_0 : i32, i32
  }
  func.func @transform_3(%arg0: i32) -> (i32, i32, i32) {
    %c0_i32 = arith.constant 0 : i32
    %c0_i32_0 = arith.constant 0 : i32
    %c0_i32_1 = arith.constant 0 : i32
    return %arg0, %c0_i32, %c0_i32_0 : i32, i32, i32
  }
}

</mosaic_0001>

<llo_original>
// kernel: downsample_time_stride4.1
$region0: #{downsample_time_stride4.1}
  #allocation0 [shape = 'u32[]', space=smem, size = 0x4, offset = 0x4, fixed_abs, tag = 'smem constant byte address 0x4 - core index']
  #allocation1 [shape = 'u32[72,128]{1,0:T(1,128)}', space=vmem, size = 0x9000, scoped, tag = 'internal scratch']
  %s0 = inlined_call_operand.vmem [shape: f32[2,5,10,32], index: 0, kind: input, shape index: {}]
  %s1 = inlined_call_operand.vmem [shape: f32[6,32,4], index: 1, kind: input, shape index: {}]
  %s2 = inlined_call_operand.vmem [shape: f32[1,4], index: 2, kind: input, shape index: {}]
  %s3 = inlined_call_operand.vmem [shape: f32[2,32,4], index: 3, kind: output, shape index: {}]
  %s4 = sld [smem:[#allocation0]]
  $region45: #{downsample_time_stride4.1} parent=0
    _
  %s6 = ssub.s32 1, %s4
  %s7 = scalar_select 0, %s6, %s4
  loop: start=0, step=1, limit=4
  $region2: #{downsample_time_stride4.1} parent=0 // loop_pre_header
    _
  $region3: #{downsample_time_stride4.1} parent=0 // loop_header
    %s9 = sphi 0, %s13
    %p10 = scmp.ge.s32.totalorder %s9, 4
    %s19 = sphi 0, %s21
    %s22 = sphi 0, %s19
    %s23 = sphi 0, %s22
    %s39 = sphi 0, %s23
    %s43 = sphi 0, %s43
    %s45 = sphi 0, %s43
    %s46 = sphi 0, %s45
    %s60 = sphi 0, %s46
    %s64 = sphi 0, %s64
    %s66 = sphi 0, %s64
    %s67 = sphi 0, %s66
    %s81 = sphi 0, %s67
    %s87 = sphi 0, %s89
    %s90 = sphi 0, %s87
    %s91 = sphi 0, %s90
    %s107 = sphi 0, %s91
  $region4: #{downsample_time_stride4.1} parent=0 // loop_header_branch
    %12 = sbr.rel (%p10) target = $region8
  $region5: #{downsample_time_stride4.1} parent=0 // loop_body
    %s14 = ssub.s32 %s9, 1
    %s15 = ssub.s32 %s9, 2
    %s16 = sadd.s32 %s9, 1
    %s17 = ssub.s32 %s9, %s16
    %p18 = scmp.eq.s32.totalorder %s17, 0
    %s20 = sadd.s32 %s19, 1
    %s21 = scalar_select %p18, %s19, %s20
    %p24 = pneg %p18
    %p25 = scmp.eq.s32.totalorder %s9, 1
    %p26 = por %p24, %p25
    %p27 = scmp.ne.s32.totalorder %s19, %s22
    %p28 = scmp.eq.s32.totalorder %s9, 0
    %p29 = por %p27, %p28
    %p30 = scmp.ne.s32.totalorder %s19, %s22
    %p31 = scmp.eq.s32.totalorder %s14, 1
    %p32 = por %p30, %p31
    %p33 = scmp.ne.s32.totalorder %s22, %s23
    %p34 = scmp.eq.s32.totalorder %s14, 0
    %p35 = por %p33, %p34
    %p36 = scmp.ne.s32.totalorder %s22, %s23
    %p37 = scmp.eq.s32.totalorder %s15, 1
    %p38 = por %p36, %p37
    %p40 = scmp.ne.s32.totalorder %s23, %s39
    %p41 = scmp.eq.s32.totalorder %s15, 0
    %p42 = por %p40, %p41
    %s44 = sadd.s32 %s43, 1
    %p47 = scmp.eq.s32.totalorder %s9, 1
    %p48 = scmp.ne.s32.totalorder %s43, %s45
    %p49 = scmp.eq.s32.totalorder %s9, 0
    %p50 = por %p48, %p49
    %p51 = scmp.ne.s32.totalorder %s43, %s45
    %p52 = scmp.eq.s32.totalorder %s14, 1
    %p53 = por %p51, %p52
    %p54 = scmp.ne.s32.totalorder %s45, %s46
    %p55 = scmp.eq.s32.totalorder %s14, 0
    %p56 = por %p54, %p55
    %p57 = scmp.ne.s32.totalorder %s45, %s46
    %p58 = scmp.eq.s32.totalorder %s15, 1
    %p59 = por %p57, %p58
    %p61 = scmp.ne.s32.totalorder %s46, %s60
    %p62 = scmp.eq.s32.totalorder %s15, 0
    %p63 = por %p61, %p62
    %s65 = sadd.s32 %s64, 1
    %p68 = scmp.eq.s32.totalorder %s9, 1
    %p69 = scmp.ne.s32.totalorder %s64, %s66
    %p70 = scmp.eq.s32.totalorder %s9, 0
    %p71 = por %p69, %p70
    %p72 = scmp.ne.s32.totalorder %s64, %s66
    %p73 = scmp.eq.s32.totalorder %s14, 1
    %p74 = por %p72, %p73
    %p75 = scmp.ne.s32.totalorder %s66, %s67
    %p76 = scmp.eq.s32.totalorder %s14, 0
    %p77 = por %p75, %p76
    %p78 = scmp.ne.s32.totalorder %s66, %s67
    %p79 = scmp.eq.s32.totalorder %s15, 1
    %p80 = por %p78, %p79
    %p82 = scmp.ne.s32.totalorder %s67, %s81
    %p83 = scmp.eq.s32.totalorder %s15, 0
    %p84 = por %p82, %p83
    %s85 = ssub.s32 %s9, %s16
    %p86 = scmp.eq.s32.totalorder %s85, 0
    %s88 = sadd.s32 %s87, 1
    %s89 = scalar_select %p86, %s87, %s88
    %p92 = pneg %p86
    %p93 = scmp.eq.s32.totalorder %s9, 1
    %p94 = por %p92, %p93
    %p95 = scmp.ne.s32.totalorder %s87, %s90
    %p96 = scmp.eq.s32.totalorder %s9, 0
    %p97 = por %p95, %p96
    %p98 = scmp.ne.s32.totalorder %s87, %s90
    %p99 = scmp.eq.s32.totalorder %s14, 1
    %p100 = por %p98, %p99
    %p101 = scmp.ne.s32.totalorder %s90, %s91
    %p102 = scmp.eq.s32.totalorder %s14, 0
    %p103 = por %p101, %p102
    %p104 = scmp.ne.s32.totalorder %s90, %s91
    %p105 = scmp.eq.s32.totalorder %s15, 1
    %p106 = por %p104, %p105
    %p108 = scmp.ne.s32.totalorder %s91, %s107
    %p109 = scmp.eq.s32.totalorder %s15, 0
    %p110 = por %p108, %p109
    %p111 = scmp.le.s32.totalorder 1, %s9
    %p112 = scmp.lt.s32.totalorder %s9, 3
    %p113 = pnand %p111, %p112
    %p114 = pneg %p113
    // Predicated region
    $region9: #{downsample_time_stride4.1} parent=5 // pred_check
      _
    $region10: #{downsample_time_stride4.1} parent=5 // pred_check_branch
      %116 = sbr.rel (%p113) target = $region12
    $region11: #{downsample_time_stride4.1} parent=5 // pred_region
      %s117 = ssub.s32 %s9, 1
      // Predicated region
      $region13: #{downsample_time_stride4.1} parent=11 // pred_check
        %p118 = pneg %p56
      $region14: #{downsample_time_stride4.1} parent=11 // pred_check_branch
        %120 = sbr.rel (%p118) target = $region16
      $region15: #{downsample_time_stride4.1} parent=11 // pred_region
        _
      $region16: #{downsample_time_stride4.1} parent=11 // pred_fallthru
        _
      // Predicated region
      $region17: #{downsample_time_stride4.1} parent=11 // pred_check
        %p121 = pneg %p77
      $region18: #{downsample_time_stride4.1} parent=11 // pred_check_branch
        %123 = sbr.rel (%p121) target = $region20
      $region19: #{downsample_time_stride4.1} parent=11 // pred_region
        _
      $region20: #{downsample_time_stride4.1} parent=11 // pred_fallthru
        _
    $region12: #{downsample_time_stride4.1} parent=5 // pred_fallthru
      _
    %p124 = scmp.lt.s32.totalorder %s9, 2
    // Predicated region
    $region21: #{downsample_time_stride4.1} parent=5 // pred_check
      %p125 = pneg %p124
    $region22: #{downsample_time_stride4.1} parent=5 // pred_check_branch
      %127 = sbr.rel (%p125) target = $region24
    $region23: #{downsample_time_stride4.1} parent=5 // pred_region
      // Predicated region
      $region25: #{downsample_time_stride4.1} parent=23 // pred_check
        %p128 = pneg %p29
      $region26: #{downsample_time_stride4.1} parent=23 // pred_check_branch
        %130 = sbr.rel (%p128) target = $region28
      $region27: #{downsample_time_stride4.1} parent=23 // pred_region
        %p131 = scmp.lt.s32.totalorder %s9, 1
        %s132 = scalar_select %p131, %s9, 1
        %s133 = smul.addr %s132, 10
        %s134 = smul.addr %s133, 8
        %s135 = scalar_lea.vmem %s0, %s134
      $region28: #{downsample_time_stride4.1} parent=23 // pred_fallthru
        _
    $region24: #{downsample_time_stride4.1} parent=5 // pred_fallthru
      _
    %p136 = scmp.le.s32.totalorder 1, %s9
    %p137 = scmp.lt.s32.totalorder %s9, 3
    %p138 = pnand %p136, %p137
    %p139 = pneg %p138
    // Predicated region
    $region29: #{downsample_time_stride4.1} parent=5 // pred_check
      _
    $region30: #{downsample_time_stride4.1} parent=5 // pred_check_branch
      %141 = sbr.rel (%p138) target = $region32
    $region31: #{downsample_time_stride4.1} parent=5 // pred_region
      %s142 = ssub.s32 %s9, 1
      %p143 = scmp.lt.s32.totalorder %s14, 1
      %s144 = scalar_select %p143, %s14, 1
      %s145 = smul.addr %s144, 10
      %s146 = smul.addr %s145, 8
      %s147 = scalar_lea.vmem %s0, %s146
      %p148 = pneg %p35
      %p149 = pneg %p32
      %p150 = pneg %p56
      %p151 = pneg %p53
      %p152 = pneg %p77
      %p153 = pneg %p74
      %p154 = pneg %p103
      %p155 = pneg %p100
      %p156 = scmp.lt.s32.totalorder %s14, 1
      %s157 = scalar_select %p156, %s14, 1
      %s158 = smul.addr %s157, 4
      %s159 = smul.addr %s158, 8
      %s160 = scalar_lea.vmem %s3, %s159
      %p161 = scmp.lt.s32.totalorder %s14, 1
      %s162 = scalar_select %p161, %s14, 1
      %s163 = smul.addr %s162, 10
      %s164 = smul.addr %s163, 8
      %s165 = scalar_lea.vmem %s0, %s164
      %p166 = scmp.lt.s32.totalorder %s14, 1
      %s167 = scalar_select %p166, %s14, 1
      %s168 = smul.addr %s167, 4
      %s169 = smul.addr %s168, 8
      %s170 = scalar_lea.vmem %s3, %s169
      %v171 = vld [vmem:[%s165] sm:$0xff]
      %v172 = vld [vmem:[%s165 + $0x8] sm:$0x3]
      %v173 = vld [vmem:[%s165 + $0x10] sm:$0xff]
      %v174 = vld [vmem:[%s165 + $0x18] sm:$0x3]
      %v175 = vld [vmem:[%s165 + $0x20] sm:$0xff]
      %v176 = vld [vmem:[%s165 + $0x28] sm:$0x3]
      %v177 = vld [vmem:[%s165 + $0x30] sm:$0xff]
      %v178 = vld [vmem:[%s165 + $0x38] sm:$0x3]
      %v179 = vld [vmem:[%s165 + $0x40] sm:$0xff]
      %v180 = vld [vmem:[%s165 + $0x48] sm:$0x3]
      %v181 = vld [vmem:[%s1] sm:$0xff]
      %v182 = vld [vmem:[%s1 + $0x8] sm:$0xff]
      %v183 = vld [vmem:[%s1 + $0x10] sm:$0xff]
      %v184 = vld [vmem:[%s1 + $0x18] sm:$0xff]
      %vm193 = vcmask 1046528
      %v194 = vrot.slane %v171, 1
      %v195 = vrot.slane %v172, 1
      %v196 = vsel %vm193, %v194, %v195
      %v197 = vrot.slane %v173, 1
      %v198 = vrot.slane %v174, 1
      %v199 = vsel %vm193, %v197, %v198
      %v200 = vrot.slane %v175, 1
      %v201 = vrot.slane %v176, 1
      %v202 = vsel %vm193, %v200, %v201
      %v203 = vrot.slane %v177, 1
      %v204 = vrot.slane %v178, 1
      %v205 = vsel %vm193, %v203, %v204
      %s206 = scalar_lea.vmem %s1, 32
      %v207 = vld [vmem:[%s206] sm:$0xff]
      %v208 = vld [vmem:[%s206 + $0x8] sm:$0xff]
      %v209 = vld [vmem:[%s206 + $0x10] sm:$0xff]
      %v210 = vld [vmem:[%s206 + $0x18] sm:$0xff]
      %vm211 = vcmask 261120
      %v212 = vsel %vm211, %v196, 0
      %v214 = vsel %vm211, %v199, 0
      %v216 = vsel %vm211, %v202, 0
      %v218 = vsel %vm211, %v205, 0
      %220 = vmatpush.msra.mxu0 0.0
      %221 = vmatpush.msra.mxu0 0.0
      %222 = vmatpush.msra.mxu0 0.0
      %223 = vmatpush.msra.mxu0 0.0
      %224 = vmatpush.msra.mxu0 0.0
      %225 = vmatpush.msra.mxu0 0.0
      %226 = vmatpush.msra.mxu0 0.0
      %227 = vmatpush.msra.mxu0 0.0
      %228 = vmatpush.msra.mxu0 0.0
      %229 = vmatpush.msra.mxu0 0.0
      %230 = vmatpush.msra.mxu0 0.0
      %231 = vmatpush.msra.mxu0 0.0
      %232 = vmatpush.msra.mxu0 %v210
      %233 = vmatpush.msra.mxu0 %v209
      %234 = vmatpush.msra.mxu0 %v208
      %235 = vmatpush.msra.mxu0 %v207
      %236 = vmatmul.f32.gmra.mxu0 %v212
      %v237 = vpop.f32.mrf.mxu0
      %v238 = vadd.f32 0.0, %v237
      %239 = vmatmul.f32.gmra.mxu0 %v214
      %v240 = vpop.f32.mrf.mxu0
      %v241 = vadd.f32 0.0, %v240
      %242 = vmatmul.f32.gmra.mxu0 %v216
      %v243 = vpop.f32.mrf.mxu0
      %v244 = vadd.f32 0.0, %v243
      %245 = vmatmul.f32.gmra.mxu0 %v218
      %v246 = vpop.f32.mrf.mxu0
      %v247 = vadd.f32 0.0, %v246
      %248 = vdwg.mxu0
      %v249 = vsel %vm211, %v171, 0
      %v251 = vsel %vm211, %v173, 0
      %v253 = vsel %vm211, %v175, 0
      %v255 = vsel %vm211, %v177, 0
      %257 = vmatpush.msra.mxu0 0.0
      %258 = vmatpush.msra.mxu0 0.0
      %259 = vmatpush.msra.mxu0 0.0
      %260 = vmatpush.msra.mxu0 0.0
      %261 = vmatpush.msra.mxu0 0.0
      %262 = vmatpush.msra.mxu0 0.0
      %263 = vmatpush.msra.mxu0 0.0
      %264 = vmatpush.msra.mxu0 0.0
      %265 = vmatpush.msra.mxu0 0.0
      %266 = vmatpush.msra.mxu0 0.0
      %267 = vmatpush.msra.mxu0 0.0
      %268 = vmatpush.msra.mxu0 0.0
      %269 = vmatpush.msra.mxu0 %v184
      %270 = vmatpush.msra.mxu0 %v183
      %271 = vmatpush.msra.mxu0 %v182
      %272 = vmatpush.msra.mxu0 %v181
      %273 = vmatmul.f32.gmra.mxu0 %v249
      %v274 = vpop.f32.mrf.mxu0
      %v275 = vadd.f32 %v238, %v274
      %276 = vmatmul.f32.gmra.mxu0 %v251
      %v277 = vpop.f32.mrf.mxu0
      %v278 = vadd.f32 %v241, %v277
      %279 = vmatmul.f32.gmra.mxu0 %v253
      %v280 = vpop.f32.mrf.mxu0
      %v281 = vadd.f32 %v244, %v280
      %282 = vmatmul.f32.gmra.mxu0 %v255
      %v283 = vpop.f32.mrf.mxu0
      %v284 = vadd.f32 %v247, %v283
      %285 = vdwg.mxu0
      %vm286 = vcmask 1045504
      %v287 = vrot.slane %v171, 2
      %v288 = vrot.slane %v172, 2
      %v289 = vsel %vm286, %v287, %v288
      %v290 = vrot.slane %v173, 2
      %v291 = vrot.slane %v174, 2
      %v292 = vsel %vm286, %v290, %v291
      %v293 = vrot.slane %v175, 2
      %v294 = vrot.slane %v176, 2
      %v295 = vsel %vm286, %v293, %v294
      %v296 = vrot.slane %v177, 2
      %v297 = vrot.slane %v178, 2
      %v298 = vsel %vm286, %v296, %v297
      %s299 = scalar_lea.vmem %s1, 64
      %v300 = vld [vmem:[%s299] sm:$0xff]
      %v301 = vld [vmem:[%s299 + $0x8] sm:$0xff]
      %v302 = vld [vmem:[%s299 + $0x10] sm:$0xff]
      %v303 = vld [vmem:[%s299 + $0x18] sm:$0xff]
      %v304 = vsel %vm211, %v289, 0
      %v306 = vsel %vm211, %v292, 0
      %v308 = vsel %vm211, %v295, 0
      %v310 = vsel %vm211, %v298, 0
      %312 = vmatpush.msra.mxu0 0.0
      %313 = vmatpush.msra.mxu0 0.0
      %314 = vmatpush.msra.mxu0 0.0
      %315 = vmatpush.msra.mxu0 0.0
      %316 = vmatpush.msra.mxu0 0.0
      %317 = vmatpush.msra.mxu0 0.0
      %318 = vmatpush.msra.mxu0 0.0
      %319 = vmatpush.msra.mxu0 0.0
      %320 = vmatpush.msra.mxu0 0.0
      %321 = vmatpush.msra.mxu0 0.0
      %322 = vmatpush.msra.mxu0 0.0
      %323 = vmatpush.msra.mxu0 0.0
      %324 = vmatpush.msra.mxu0 %v303
      %325 = vmatpush.msra.mxu0 %v302
      %326 = vmatpush.msra.mxu0 %v301
      %327 = vmatpush.msra.mxu0 %v300
      %328 = vmatmul.f32.gmra.mxu0 %v304
      %v329 = vpop.f32.mrf.mxu0
      %v330 = vadd.f32 0.0, %v329
      %331 = vmatmul.f32.gmra.mxu0 %v306
      %v332 = vpop.f32.mrf.mxu0
      %v333 = vadd.f32 0.0, %v332
      %334 = vmatmul.f32.gmra.mxu0 %v308
      %v335 = vpop.f32.mrf.mxu0
      %v336 = vadd.f32 0.0, %v335
      %337 = vmatmul.f32.gmra.mxu0 %v310
      %v338 = vpop.f32.mrf.mxu0
      %v339 = vadd.f32 0.0, %v338
      %340 = vdwg.mxu0
      %v341 = vadd.f32 %v275, %v330
      %v342 = vadd.f32 %v278, %v333
      %v343 = vadd.f32 %v281, %v336
      %v344 = vadd.f32 %v284, %v339
      %s345 = scalar_lea.vmem %s1, 96
      %v346 = vld [vmem:[%s345] sm:$0xff]
      %v347 = vld [vmem:[%s345 + $0x8] sm:$0xff]
      %v348 = vld [vmem:[%s345 + $0x10] sm:$0xff]
      %v349 = vld [vmem:[%s345 + $0x18] sm:$0xff]
      %v351 = vsel %vm211, %v179, 0
      %353 = vmatpush.msra.mxu0 0.0
      %354 = vmatpush.msra.mxu0 0.0
      %355 = vmatpush.msra.mxu0 0.0
      %356 = vmatpush.msra.mxu0 0.0
      %357 = vmatpush.msra.mxu0 0.0
      %358 = vmatpush.msra.mxu0 0.0
      %359 = vmatpush.msra.mxu0 0.0
      %360 = vmatpush.msra.mxu0 0.0
      %361 = vmatpush.msra.mxu0 0.0
      %362 = vmatpush.msra.mxu0 0.0
      %363 = vmatpush.msra.mxu0 0.0
      %364 = vmatpush.msra.mxu0 0.0
      %365 = vmatpush.msra.mxu0 %v349
      %366 = vmatpush.msra.mxu0 %v348
      %367 = vmatpush.msra.mxu0 %v347
      %368 = vmatpush.msra.mxu0 %v346
      %369 = vmatmul.f32.gmra.mxu0 %v251
      %v370 = vpop.f32.mrf.mxu0
      %v371 = vadd.f32 0.0, %v370
      %372 = vmatmul.f32.gmra.mxu0 %v253
      %v373 = vpop.f32.mrf.mxu0
      %v374 = vadd.f32 0.0, %v373
      %375 = vmatmul.f32.gmra.mxu0 %v255
      %v376 = vpop.f32.mrf.mxu0
      %v377 = vadd.f32 0.0, %v376
      %378 = vmatmul.f32.gmra.mxu0 %v351
      %v379 = vpop.f32.mrf.mxu0
      %v380 = vadd.f32 0.0, %v379
      %381 = vdwg.mxu0
      %v382 = vadd.f32 %v341, %v371
      %v383 = vadd.f32 %v342, %v374
      %v384 = vadd.f32 %v343, %v377
      %v385 = vadd.f32 %v344, %v380
      %v387 = vrot.slane %v179, 1
      %v388 = vrot.slane %v180, 1
      %v389 = vsel %vm193, %v387, %v388
      %s390 = scalar_lea.vmem %s1, 128
      %v391 = vld [vmem:[%s390] sm:$0xff]
      %v392 = vld [vmem:[%s390 + $0x8] sm:$0xff]
      %v393 = vld [vmem:[%s390 + $0x10] sm:$0xff]
      %v394 = vld [vmem:[%s390 + $0x18] sm:$0xff]
      %v395 = vsel %vm211, %v389, 0
      %397 = vmatpush.msra.mxu0 0.0
      %398 = vmatpush.msra.mxu0 0.0
      %399 = vmatpush.msra.mxu0 0.0
      %400 = vmatpush.msra.mxu0 0.0
      %401 = vmatpush.msra.mxu0 0.0
      %402 = vmatpush.msra.mxu0 0.0
      %403 = vmatpush.msra.mxu0 0.0
      %404 = vmatpush.msra.mxu0 0.0
      %405 = vmatpush.msra.mxu0 0.0
      %406 = vmatpush.msra.mxu0 0.0
      %407 = vmatpush.msra.mxu0 0.0
      %408 = vmatpush.msra.mxu0 0.0
      %409 = vmatpush.msra.mxu0 %v394
      %410 = vmatpush.msra.mxu0 %v393
      %411 = vmatpush.msra.mxu0 %v392
      %412 = vmatpush.msra.mxu0 %v391
      %413 = vmatmul.f32.gmra.mxu0 %v214
      %v414 = vpop.f32.mrf.mxu0
      %v415 = vadd.f32 0.0, %v414
      %416 = vmatmul.f32.gmra.mxu0 %v216
      %v417 = vpop.f32.mrf.mxu0
      %v418 = vadd.f32 0.0, %v417
      %419 = vmatmul.f32.gmra.mxu0 %v218
      %v420 = vpop.f32.mrf.mxu0
      %v421 = vadd.f32 0.0, %v420
      %422 = vmatmul.f32.gmra.mxu0 %v395
      %v423 = vpop.f32.mrf.mxu0
      %v424 = vadd.f32 0.0, %v423
      %425 = vdwg.mxu0
      %v426 = vadd.f32 %v382, %v415
      %v427 = vadd.f32 %v383, %v418
      %v428 = vadd.f32 %v384, %v421
      %v429 = vadd.f32 %v385, %v424
      %v430 = vrot.slane %v179, 2
      %v431 = vrot.slane %v180, 2
      %v432 = vsel %vm286, %v430, %v431
      %s433 = scalar_lea.vmem %s1, 160
      %v434 = vld [vmem:[%s433] sm:$0xff]
      %v435 = vld [vmem:[%s433 + $0x8] sm:$0xff]
      %v436 = vld [vmem:[%s433 + $0x10] sm:$0xff]
      %v437 = vld [vmem:[%s433 + $0x18] sm:$0xff]
      %v438 = vsel %vm211, %v432, 0
      %440 = vmatpush.msra.mxu0 0.0
      %441 = vmatpush.msra.mxu0 0.0
      %442 = vmatpush.msra.mxu0 0.0
      %443 = vmatpush.msra.mxu0 0.0
      %444 = vmatpush.msra.mxu0 0.0
      %445 = vmatpush.msra.mxu0 0.0
      %446 = vmatpush.msra.mxu0 0.0
      %447 = vmatpush.msra.mxu0 0.0
      %448 = vmatpush.msra.mxu0 0.0
      %449 = vmatpush.msra.mxu0 0.0
      %450 = vmatpush.msra.mxu0 0.0
      %451 = vmatpush.msra.mxu0 0.0
      %452 = vmatpush.msra.mxu0 %v437
      %453 = vmatpush.msra.mxu0 %v436
      %454 = vmatpush.msra.mxu0 %v435
      %455 = vmatpush.msra.mxu0 %v434
      %456 = vmatmul.f32.gmra.mxu0 %v306
      %v457 = vpop.f32.mrf.mxu0
      %v458 = vadd.f32 0.0, %v457
      %459 = vmatmul.f32.gmra.mxu0 %v308
      %v460 = vpop.f32.mrf.mxu0
      %v461 = vadd.f32 0.0, %v460
      %462 = vmatmul.f32.gmra.mxu0 %v310
      %v463 = vpop.f32.mrf.mxu0
      %v464 = vadd.f32 0.0, %v463
      %465 = vmatmul.f32.gmra.mxu0 %v438
      %v466 = vpop.f32.mrf.mxu0
      %v467 = vadd.f32 0.0, %v466
      %468 = vdwg.mxu0
      %v469 = vadd.f32 %v426, %v458
      %v470 = vadd.f32 %v427, %v461
      %v471 = vadd.f32 %v428, %v464
      %v472 = vadd.f32 %v429, %v467
      %v473 = vld [vmem:[%s2] sm:$0x1]
      %v475 = vperm.slane %v473, 0
      %v477 = vadd.f32 %v469, %v475
      %v478 = vadd.f32 %v470, %v475
      %v479 = vadd.f32 %v471, %v475
      %v480 = vadd.f32 %v472, %v475
      %vm481 = vcmask 31744
      %482 = vst.msk [vmem:[%s170] sm:$0xff] %vm481, %v477
      %483 = vst.msk [vmem:[%s170 + $0x8] sm:$0xff] %vm481, %v478
      %484 = vst.msk [vmem:[%s170 + $0x10] sm:$0xff] %vm481, %v479
      %485 = vst.msk [vmem:[%s170 + $0x18] sm:$0xff] %vm481, %v480
      %p486 = scmp.lt.s32.totalorder %s14, 1
      %s487 = scalar_select %p486, %s14, 1
      %s488 = smul.addr %s487, 4
      %s489 = smul.addr %s488, 8
      %s490 = scalar_lea.vmem %s3, %s489
      // Predicated region
      $region33: #{downsample_time_stride4.1} parent=31 // pred_check
        %p491 = pneg %p100
      $region34: #{downsample_time_stride4.1} parent=31 // pred_check_branch
        %493 = sbr.rel (%p491) target = $region36
      $region35: #{downsample_time_stride4.1} parent=31 // pred_region
        _
      $region36: #{downsample_time_stride4.1} parent=31 // pred_fallthru
        _
    $region32: #{downsample_time_stride4.1} parent=5 // pred_fallthru
      _
    %p494 = scmp.le.s32.totalorder 2, %s9
    // Predicated region
    $region37: #{downsample_time_stride4.1} parent=5 // pred_check
      %p495 = pneg %p494
    $region38: #{downsample_time_stride4.1} parent=5 // pred_check_branch
      %497 = sbr.rel (%p495) target = $region40
    $region39: #{downsample_time_stride4.1} parent=5 // pred_region
      %s498 = ssub.s32 %s9, 2
      // Predicated region
      $region41: #{downsample_time_stride4.1} parent=39 // pred_check
        %p499 = pneg %p106
      $region42: #{downsample_time_stride4.1} parent=39 // pred_check_branch
        %501 = sbr.rel (%p499) target = $region44
      $region43: #{downsample_time_stride4.1} parent=39 // pred_region
        %p502 = scmp.lt.s32.totalorder %s15, 1
        %s503 = scalar_select %p502, %s15, 1
        %s504 = smul.addr %s503, 4
        %s505 = smul.addr %s504, 8
        %s506 = scalar_lea.vmem %s3, %s505
      $region44: #{downsample_time_stride4.1} parent=39 // pred_fallthru
        _
    $region40: #{downsample_time_stride4.1} parent=5 // pred_fallthru
      _
  $region6: #{downsample_time_stride4.1} parent=0 // loop_footer
    %s13 = sadd.s32 1, %s9
  $region7: #{downsample_time_stride4.1} parent=0 // loop_footer_branch
    %8 = sbr.rel target = $region3
  $region8: #{downsample_time_stride4.1} parent=0 // loop_exit
    _

</llo_original>
